<compile_context>
chip_gen: v7x
topology: tpu7x:2x2x1
jax: 0.10.0
libtpu: 0.0.40
codegen_flags: <defaults>
</compile_context>

<pallas_src>
import functools

import jax
import jax.numpy as jnp
from jax.experimental import pallas as pl
from jax.experimental.pallas import tpu as pltpu


def _coattention_kernel(x_ref, yt_ref, wx_ref, wyt_ref, bias_ref, a_ref,
                        out_ref, *, use_bf16_tanh=False):
    # x_ref:    (Bt, tm, F)  VMEM   row-side operand ("keys" role)
    # yt_ref:   (Bt, F, tn)  VMEM   lane-side operand, pre-transposed ("queries" role)
    # wx_ref:   (F, d)       VMEM
    # wyt_ref:  (d, F)       VMEM
    # bias_ref: (1, d)       VMEM
    # a_ref:    (d,)         SMEM
    # out_ref:  (Bt, tm, tn) VMEM
    bt = x_ref.shape[0]
    d = wx_ref.shape[1]

    for b in range(bt):             # static unroll: batch fusion per grid step
        # Row-side projection, bias folded in once -> (tm, d).
        rows = jnp.dot(x_ref[b], wx_ref[...],
                       preferred_element_type=jnp.float32) + bias_ref[...]
        # Lane-side projection directly in (d, tn) layout; activation arrives
        # pre-transposed so this is a plain matmul (no implicit transpose).
        cols = jnp.dot(wyt_ref[...], yt_ref[b],
                       preferred_element_type=jnp.float32)

        tm = rows.shape[0]
        tn = cols.shape[1]
        acc = jnp.zeros((tm, tn), jnp.float32)
        for j in range(d):          # static unroll over the small feature dim
            s = rows[:, j:j + 1] + cols[j:j + 1, :]
            if use_bf16_tanh:
                # v6e/v7x only: EUP handles bf16 (2 packed elems/lane) ~2x.
                t = jnp.tanh(s.astype(jnp.bfloat16)).astype(jnp.float32)
            else:
                t = jnp.tanh(s)
            acc = acc + a_ref[j] * t
        out_ref[b] = acc.astype(out_ref.dtype)


def _round_up(x, m):
    return ((x + m - 1) // m) * m


def _coattention_impl(x, y, w_x, w_y, bias, a, *, use_bf16_tanh=False):
    """score[b, i, j] = a . tanh(x[b, i] @ w_x + y[b, j] @ w_y + bias)."""
    B, Nx, F = x.shape
    _, Ny, _ = y.shape
    d = w_x.shape[1]

    # Sublane (row) tiling: multiple of 8, tile <= 128.
    Nx_p = _round_up(max(Nx, 8), 8)
    if Nx_p > 128:
        tm = 128
        Nx_p = _round_up(Nx_p, tm)
    else:
        tm = Nx_p
    # Lane (col) tiling: multiple of 128, tile <= 256 so the live f32
    # accumulator stays <= 128 KiB (no vreg spill, esp. on v5e's 1 vst slot).
    Ny_p = _round_up(max(Ny, 128), 128)
    if Ny_p > 256:
        tn = 256
        Ny_p = _round_up(Ny_p, tn)
    else:
        tn = Ny_p

    n_row_tiles = Nx_p // tm
    n_col_tiles = Ny_p // tn

    # Batch fusion: if one batch is a single tiny tile, fuse batches into each
    # grid step to amortize per-step overhead, but keep >= 2 grid steps so
    # both v7x TensorCores get work.  Cap Bt by a per-step VMEM footprint.
    if n_row_tiles * n_col_tiles >= 2:
        Bt = 1
    else:
        Bt = max(1, B // 2)
    per_batch_bytes = (tm * F + F * tn + tm * tn) * 4
    Bt = max(1, min(Bt, (4 << 20) // max(per_batch_bytes, 1)))
    B_p = _round_up(B, Bt)

    x_p = x
    if (B_p, Nx_p) != (B, Nx):
        x_p = jnp.pad(x, ((0, B_p - B), (0, Nx_p - Nx), (0, 0)))
    y_p = y
    if (B_p, Ny_p) != (B, Ny):
        y_p = jnp.pad(y, ((0, B_p - B), (0, Ny_p - Ny), (0, 0)))
    # Pre-transpose the lane-side operand (XLA-side, amortized) so the kernel
    # needs no in-kernel transpose of the activation tile.
    y_t = jnp.transpose(y_p, (0, 2, 1))                    # (B_p, F, Ny_p)

    wy_t = jnp.transpose(w_y)                              # (d, F)
    bias2d = bias.reshape(1, d).astype(jnp.float32)
    a1d = a.astype(jnp.float32)

    kernel = functools.partial(_coattention_kernel, use_bf16_tanh=use_bf16_tanh)

    out_p = pl.pallas_call(
        kernel,
        out_shape=jax.ShapeDtypeStruct((B_p, Nx_p, Ny_p), jnp.float32),
        grid_spec=pltpu.PrefetchScalarGridSpec(
            num_scalar_prefetch=0,
            grid=(B_p // Bt, n_row_tiles, n_col_tiles),
            in_specs=[
                pl.BlockSpec((Bt, tm, F), lambda g, m, n: (g, m, 0)),
                pl.BlockSpec((Bt, F, tn), lambda g, m, n: (g, 0, n)),
                # Grid-invariant weights (constant index_map).
                pl.BlockSpec((F, d), lambda g, m, n: (0, 0)),
                pl.BlockSpec((d, F), lambda g, m, n: (0, 0)),
                pl.BlockSpec((1, d), lambda g, m, n: (0, 0)),
                pl.BlockSpec(memory_space=pltpu.MemorySpace.SMEM),
            ],
            out_specs=pl.BlockSpec((Bt, tm, tn), lambda g, m, n: (g, m, n)),
        ),
        compiler_params=pltpu.CompilerParams(
            # Every output tile is independent -> all axes parallel (megacore).
            dimension_semantics=("parallel", "parallel", "parallel"),
            # 32 MiB == v7x scoped default; only raises v5e's 16 MiB default.
            vmem_limit_bytes=32 * 1024 * 1024,
        ),
    )(x_p, y_t, w_x, wy_t, bias2d, a1d)

    return out_p[:B, :Nx, :Ny]


def coattention(receiver, attendant, w_k, w_q, bias, a, *, use_bf16_tanh=False):
    """CoAttentionLayer.forward -> (B, Nr, Na) attention scores."""
    _, Nr, _ = receiver.shape
    _, Na, _ = attendant.shape
    if Nr > Na:
        # Put the larger axis on lanes (less EUP lane-padding waste): the
        # score is symmetric under swapping operand roles, up to a transpose.
        out_t = _coattention_impl(attendant, receiver, w_q, w_k, bias, a,
                                  use_bf16_tanh=use_bf16_tanh)
        return jnp.transpose(out_t, (0, 2, 1))
    # Note: if both Nr and Na are tiny in production, packing several batches
    # along the lane axis (MXU rank-1 expand per j) would further cut EUP
    # waste; not needed at these shapes.
    return _coattention_impl(receiver, attendant, w_k, w_q, bias, a,
                             use_bf16_tanh=use_bf16_tanh)


def xavier_uniform(key, shape, fan_in, fan_out):
    bound = (6.0 / (fan_in + fan_out)) ** 0.5
    return jax.random.uniform(key, shape, jnp.float32, -bound, bound)


if __name__ == "__main__":
    B, S, F = 2, 8, 32          # batch, sequence, n_features
    d = F // 2

    key = jax.random.PRNGKey(0)
    k_r, k_a, k_wq, k_wk, k_b, k_av = jax.random.split(key, 6)

    receiver = jax.random.normal(k_r, (B, S, F), jnp.float32)
    attendant = jax.random.normal(k_a, (B, S, F), jnp.float32)

    # Deterministic xavier_uniform init matching nn.init semantics.
    w_q = xavier_uniform(k_wq, (F, d), fan_in=d, fan_out=F)   # torch 2D: fan_in=dim1, fan_out=dim0
    w_k = xavier_uniform(k_wk, (F, d), fan_in=d, fan_out=F)
    bias = xavier_uniform(k_b, (d,), fan_in=1, fan_out=d)     # bias.view(d, 1)
    a = xavier_uniform(k_av, (d,), fan_in=1, fan_out=d)       # a.view(d, 1)

    out = coattention(receiver, attendant, w_k, w_q, bias, a)
    out = jax.block_until_ready(out)

    # Pure-JAX reference check.
    keys_ref = receiver @ w_k
    queries_ref = attendant @ w_q
    e_act = queries_ref[:, None, :, :] + keys_ref[:, :, None, :] + bias
    ref = jnp.tanh(e_act) @ a
    assert out.shape == (B, S, S)
    assert jnp.allclose(out, ref, atol=1e-5, rtol=1e-5)

    print("KERNEL_OK")
</pallas_src>

<mosaic_0001>
module attributes {stable_mosaic.version = 11 : i64} {
  func.func @_coattention_kernel(%arg0: i32, %arg1: i32, %arg2: i32, %arg3: memref<1x8x32xf32, #tpu.memory_space<vmem>>, %arg4: memref<1x32x128xf32, #tpu.memory_space<vmem>>, %arg5: memref<32x16xf32, #tpu.memory_space<vmem>>, %arg6: memref<16x32xf32, #tpu.memory_space<vmem>>, %arg7: memref<1x16xf32, #tpu.memory_space<vmem>>, %arg8: memref<16xf32, #tpu.memory_space<smem>>, %arg9: memref<1x8x128xf32, #tpu.memory_space<vmem>>) attributes {dimension_semantics = [#tpu.dimension_semantics<parallel>, #tpu.dimension_semantics<parallel>, #tpu.dimension_semantics<parallel>], iteration_bounds = array<i64: 2, 1, 1>, scalar_prefetch = 0 : i64, scratch_operands = 0 : i64, tpu.core_type = #tpu.core_type<tc>, window_params = [{transform_indices = @transform_0, window_bounds = array<i64: 1, 8, 32>}, {transform_indices = @transform_1, window_bounds = array<i64: 1, 32, 128>}, {pipeline_mode = #tpu.pipeline_mode<synchronous>, transform_indices = @transform_2, window_bounds = array<i64: 32, 16>}, {pipeline_mode = #tpu.pipeline_mode<synchronous>, transform_indices = @transform_3, window_bounds = array<i64: 16, 32>}, {pipeline_mode = #tpu.pipeline_mode<synchronous>, transform_indices = @transform_4, window_bounds = array<i64: 1, 16>}, {transform_indices = @transform_5, window_bounds = array<i64: 16>}, {transform_indices = @transform_6, window_bounds = array<i64: 1, 8, 128>}]} {
    %c0 = arith.constant 0 : index
    %c0_0 = arith.constant 0 : index
    %c0_1 = arith.constant 0 : index
    %0 = vector.load %arg3[%c0, %c0_0, %c0_1] : memref<1x8x32xf32, #tpu.memory_space<vmem>>, vector<1x8x32xf32>
    %1 = vector.shape_cast %0 : vector<1x8x32xf32> to vector<8x32xf32>
    %c0_2 = arith.constant 0 : index
    %c0_3 = arith.constant 0 : index
    %2 = vector.load %arg5[%c0_2, %c0_3] : memref<32x16xf32, #tpu.memory_space<vmem>>, vector<32x16xf32>
    %cst = arith.constant dense<0.000000e+00> : vector<8x16xf32>
    %3 = tpu.matmul %1, %2, %cst {dimension_numbers = #tpu.dot_dimension_numbers<[1], [0], [0], [1], [0, 0, 1, 1], [], []>} : vector<8x32xf32>, vector<32x16xf32>, vector<8x16xf32> -> vector<8x16xf32>
    %c0_4 = arith.constant 0 : index
    %c0_5 = arith.constant 0 : index
    %4 = vector.load %arg7[%c0_4, %c0_5] : memref<1x16xf32, #tpu.memory_space<vmem>>, vector<1x16xf32>
    %5 = vector.broadcast %4 : vector<1x16xf32> to vector<8x16xf32>
    %6 = arith.addf %3, %5 : vector<8x16xf32>
    %c0_6 = arith.constant 0 : index
    %c0_7 = arith.constant 0 : index
    %7 = vector.load %arg6[%c0_6, %c0_7] : memref<16x32xf32, #tpu.memory_space<vmem>>, vector<16x32xf32>
    %c0_8 = arith.constant 0 : index
    %c0_9 = arith.constant 0 : index
    %c0_10 = arith.constant 0 : index
    %8 = vector.load %arg4[%c0_8, %c0_9, %c0_10] : memref<1x32x128xf32, #tpu.memory_space<vmem>>, vector<1x32x128xf32>
    %9 = vector.shape_cast %8 : vector<1x32x128xf32> to vector<32x128xf32>
    %cst_11 = arith.constant dense<0.000000e+00> : vector<16x128xf32>
    %10 = tpu.matmul %7, %9, %cst_11 {dimension_numbers = #tpu.dot_dimension_numbers<[1], [0], [0], [1], [0, 0, 1, 1], [], []>} : vector<16x32xf32>, vector<32x128xf32>, vector<16x128xf32> -> vector<16x128xf32>
    %cst_12 = arith.constant 0.000000e+00 : f32
    %11 = vector.broadcast %cst_12 : f32 to vector<8x128xf32>
    %12 = vector.extract_strided_slice %6 {offsets = [0, 0], sizes = [8, 1], strides = [1, 1]} : vector<8x16xf32> to vector<8x1xf32>
    %13 = vector.extract_strided_slice %10 {offsets = [0, 0], sizes = [1, 128], strides = [1, 1]} : vector<16x128xf32> to vector<1x128xf32>
    %14 = vector.broadcast %12 : vector<8x1xf32> to vector<8x128xf32>
    %15 = vector.broadcast %13 : vector<1x128xf32> to vector<8x128xf32>
    %16 = arith.addf %14, %15 : vector<8x128xf32>
    %17 = math.tanh %16 : vector<8x128xf32>
    %c0_13 = arith.constant 0 : index
    %18 = memref.load %arg8[%c0_13] : memref<16xf32, #tpu.memory_space<smem>>
    %19 = vector.broadcast %18 : f32 to vector<8x128xf32>
    %20 = arith.mulf %19, %17 : vector<8x128xf32>
    %21 = arith.addf %11, %20 : vector<8x128xf32>
    %22 = vector.extract_strided_slice %6 {offsets = [0, 1], sizes = [8, 1], strides = [1, 1]} : vector<8x16xf32> to vector<8x1xf32>
    %23 = vector.extract_strided_slice %10 {offsets = [1, 0], sizes = [1, 128], strides = [1, 1]} : vector<16x128xf32> to vector<1x128xf32>
    %24 = vector.broadcast %22 : vector<8x1xf32> to vector<8x128xf32>
    %25 = vector.broadcast %23 : vector<1x128xf32> to vector<8x128xf32>
    %26 = arith.addf %24, %25 : vector<8x128xf32>
    %27 = math.tanh %26 : vector<8x128xf32>
    %c1 = arith.constant 1 : index
    %28 = memref.load %arg8[%c1] : memref<16xf32, #tpu.memory_space<smem>>
    %29 = vector.broadcast %28 : f32 to vector<8x128xf32>
    %30 = arith.mulf %29, %27 : vector<8x128xf32>
    %31 = arith.addf %21, %30 : vector<8x128xf32>
    %32 = vector.extract_strided_slice %6 {offsets = [0, 2], sizes = [8, 1], strides = [1, 1]} : vector<8x16xf32> to vector<8x1xf32>
    %33 = vector.extract_strided_slice %10 {offsets = [2, 0], sizes = [1, 128], strides = [1, 1]} : vector<16x128xf32> to vector<1x128xf32>
    %34 = vector.broadcast %32 : vector<8x1xf32> to vector<8x128xf32>
    %35 = vector.broadcast %33 : vector<1x128xf32> to vector<8x128xf32>
    %36 = arith.addf %34, %35 : vector<8x128xf32>
    %37 = math.tanh %36 : vector<8x128xf32>
    %c2 = arith.constant 2 : index
    %38 = memref.load %arg8[%c2] : memref<16xf32, #tpu.memory_space<smem>>
    %39 = vector.broadcast %38 : f32 to vector<8x128xf32>
    %40 = arith.mulf %39, %37 : vector<8x128xf32>
    %41 = arith.addf %31, %40 : vector<8x128xf32>
    %42 = vector.extract_strided_slice %6 {offsets = [0, 3], sizes = [8, 1], strides = [1, 1]} : vector<8x16xf32> to vector<8x1xf32>
    %43 = vector.extract_strided_slice %10 {offsets = [3, 0], sizes = [1, 128], strides = [1, 1]} : vector<16x128xf32> to vector<1x128xf32>
    %44 = vector.broadcast %42 : vector<8x1xf32> to vector<8x128xf32>
    %45 = vector.broadcast %43 : vector<1x128xf32> to vector<8x128xf32>
    %46 = arith.addf %44, %45 : vector<8x128xf32>
    %47 = math.tanh %46 : vector<8x128xf32>
    %c3 = arith.constant 3 : index
    %48 = memref.load %arg8[%c3] : memref<16xf32, #tpu.memory_space<smem>>
    %49 = vector.broadcast %48 : f32 to vector<8x128xf32>
    %50 = arith.mulf %49, %47 : vector<8x128xf32>
    %51 = arith.addf %41, %50 : vector<8x128xf32>
    %52 = vector.extract_strided_slice %6 {offsets = [0, 4], sizes = [8, 1], strides = [1, 1]} : vector<8x16xf32> to vector<8x1xf32>
    %53 = vector.extract_strided_slice %10 {offsets = [4, 0], sizes = [1, 128], strides = [1, 1]} : vector<16x128xf32> to vector<1x128xf32>
    %54 = vector.broadcast %52 : vector<8x1xf32> to vector<8x128xf32>
    %55 = vector.broadcast %53 : vector<1x128xf32> to vector<8x128xf32>
    %56 = arith.addf %54, %55 : vector<8x128xf32>
    %57 = math.tanh %56 : vector<8x128xf32>
    %c4 = arith.constant 4 : index
    %58 = memref.load %arg8[%c4] : memref<16xf32, #tpu.memory_space<smem>>
    %59 = vector.broadcast %58 : f32 to vector<8x128xf32>
    %60 = arith.mulf %59, %57 : vector<8x128xf32>
    %61 = arith.addf %51, %60 : vector<8x128xf32>
    %62 = vector.extract_strided_slice %6 {offsets = [0, 5], sizes = [8, 1], strides = [1, 1]} : vector<8x16xf32> to vector<8x1xf32>
    %63 = vector.extract_strided_slice %10 {offsets = [5, 0], sizes = [1, 128], strides = [1, 1]} : vector<16x128xf32> to vector<1x128xf32>
    %64 = vector.broadcast %62 : vector<8x1xf32> to vector<8x128xf32>
    %65 = vector.broadcast %63 : vector<1x128xf32> to vector<8x128xf32>
    %66 = arith.addf %64, %65 : vector<8x128xf32>
    %67 = math.tanh %66 : vector<8x128xf32>
    %c5 = arith.constant 5 : index
    %68 = memref.load %arg8[%c5] : memref<16xf32, #tpu.memory_space<smem>>
    %69 = vector.broadcast %68 : f32 to vector<8x128xf32>
    %70 = arith.mulf %69, %67 : vector<8x128xf32>
    %71 = arith.addf %61, %70 : vector<8x128xf32>
    %72 = vector.extract_strided_slice %6 {offsets = [0, 6], sizes = [8, 1], strides = [1, 1]} : vector<8x16xf32> to vector<8x1xf32>
    %73 = vector.extract_strided_slice %10 {offsets = [6, 0], sizes = [1, 128], strides = [1, 1]} : vector<16x128xf32> to vector<1x128xf32>
    %74 = vector.broadcast %72 : vector<8x1xf32> to vector<8x128xf32>
    %75 = vector.broadcast %73 : vector<1x128xf32> to vector<8x128xf32>
    %76 = arith.addf %74, %75 : vector<8x128xf32>
    %77 = math.tanh %76 : vector<8x128xf32>
    %c6 = arith.constant 6 : index
    %78 = memref.load %arg8[%c6] : memref<16xf32, #tpu.memory_space<smem>>
    %79 = vector.broadcast %78 : f32 to vector<8x128xf32>
    %80 = arith.mulf %79, %77 : vector<8x128xf32>
    %81 = arith.addf %71, %80 : vector<8x128xf32>
    %82 = vector.extract_strided_slice %6 {offsets = [0, 7], sizes = [8, 1], strides = [1, 1]} : vector<8x16xf32> to vector<8x1xf32>
    %83 = vector.extract_strided_slice %10 {offsets = [7, 0], sizes = [1, 128], strides = [1, 1]} : vector<16x128xf32> to vector<1x128xf32>
    %84 = vector.broadcast %82 : vector<8x1xf32> to vector<8x128xf32>
    %85 = vector.broadcast %83 : vector<1x128xf32> to vector<8x128xf32>
    %86 = arith.addf %84, %85 : vector<8x128xf32>
    %87 = math.tanh %86 : vector<8x128xf32>
    %c7 = arith.constant 7 : index
    %88 = memref.load %arg8[%c7] : memref<16xf32, #tpu.memory_space<smem>>
    %89 = vector.broadcast %88 : f32 to vector<8x128xf32>
    %90 = arith.mulf %89, %87 : vector<8x128xf32>
    %91 = arith.addf %81, %90 : vector<8x128xf32>
    %92 = vector.extract_strided_slice %6 {offsets = [0, 8], sizes = [8, 1], strides = [1, 1]} : vector<8x16xf32> to vector<8x1xf32>
    %93 = vector.extract_strided_slice %10 {offsets = [8, 0], sizes = [1, 128], strides = [1, 1]} : vector<16x128xf32> to vector<1x128xf32>
    %94 = vector.broadcast %92 : vector<8x1xf32> to vector<8x128xf32>
    %95 = vector.broadcast %93 : vector<1x128xf32> to vector<8x128xf32>
    %96 = arith.addf %94, %95 : vector<8x128xf32>
    %97 = math.tanh %96 : vector<8x128xf32>
    %c8 = arith.constant 8 : index
    %98 = memref.load %arg8[%c8] : memref<16xf32, #tpu.memory_space<smem>>
    %99 = vector.broadcast %98 : f32 to vector<8x128xf32>
    %100 = arith.mulf %99, %97 : vector<8x128xf32>
    %101 = arith.addf %91, %100 : vector<8x128xf32>
    %102 = vector.extract_strided_slice %6 {offsets = [0, 9], sizes = [8, 1], strides = [1, 1]} : vector<8x16xf32> to vector<8x1xf32>
    %103 = vector.extract_strided_slice %10 {offsets = [9, 0], sizes = [1, 128], strides = [1, 1]} : vector<16x128xf32> to vector<1x128xf32>
    %104 = vector.broadcast %102 : vector<8x1xf32> to vector<8x128xf32>
    %105 = vector.broadcast %103 : vector<1x128xf32> to vector<8x128xf32>
    %106 = arith.addf %104, %105 : vector<8x128xf32>
    %107 = math.tanh %106 : vector<8x128xf32>
    %c9 = arith.constant 9 : index
    %108 = memref.load %arg8[%c9] : memref<16xf32, #tpu.memory_space<smem>>
    %109 = vector.broadcast %108 : f32 to vector<8x128xf32>
    %110 = arith.mulf %109, %107 : vector<8x128xf32>
    %111 = arith.addf %101, %110 : vector<8x128xf32>
    %112 = vector.extract_strided_slice %6 {offsets = [0, 10], sizes = [8, 1], strides = [1, 1]} : vector<8x16xf32> to vector<8x1xf32>
    %113 = vector.extract_strided_slice %10 {offsets = [10, 0], sizes = [1, 128], strides = [1, 1]} : vector<16x128xf32> to vector<1x128xf32>
    %114 = vector.broadcast %112 : vector<8x1xf32> to vector<8x128xf32>
    %115 = vector.broadcast %113 : vector<1x128xf32> to vector<8x128xf32>
    %116 = arith.addf %114, %115 : vector<8x128xf32>
    %117 = math.tanh %116 : vector<8x128xf32>
    %c10 = arith.constant 10 : index
    %118 = memref.load %arg8[%c10] : memref<16xf32, #tpu.memory_space<smem>>
    %119 = vector.broadcast %118 : f32 to vector<8x128xf32>
    %120 = arith.mulf %119, %117 : vector<8x128xf32>
    %121 = arith.addf %111, %120 : vector<8x128xf32>
    %122 = vector.extract_strided_slice %6 {offsets = [0, 11], sizes = [8, 1], strides = [1, 1]} : vector<8x16xf32> to vector<8x1xf32>
    %123 = vector.extract_strided_slice %10 {offsets = [11, 0], sizes = [1, 128], strides = [1, 1]} : vector<16x128xf32> to vector<1x128xf32>
    %124 = vector.broadcast %122 : vector<8x1xf32> to vector<8x128xf32>
    %125 = vector.broadcast %123 : vector<1x128xf32> to vector<8x128xf32>
    %126 = arith.addf %124, %125 : vector<8x128xf32>
    %127 = math.tanh %126 : vector<8x128xf32>
    %c11 = arith.constant 11 : index
    %128 = memref.load %arg8[%c11] : memref<16xf32, #tpu.memory_space<smem>>
    %129 = vector.broadcast %128 : f32 to vector<8x128xf32>
    %130 = arith.mulf %129, %127 : vector<8x128xf32>
    %131 = arith.addf %121, %130 : vector<8x128xf32>
    %132 = vector.extract_strided_slice %6 {offsets = [0, 12], sizes = [8, 1], strides = [1, 1]} : vector<8x16xf32> to vector<8x1xf32>
    %133 = vector.extract_strided_slice %10 {offsets = [12, 0], sizes = [1, 128], strides = [1, 1]} : vector<16x128xf32> to vector<1x128xf32>
    %134 = vector.broadcast %132 : vector<8x1xf32> to vector<8x128xf32>
    %135 = vector.broadcast %133 : vector<1x128xf32> to vector<8x128xf32>
    %136 = arith.addf %134, %135 : vector<8x128xf32>
    %137 = math.tanh %136 : vector<8x128xf32>
    %c12 = arith.constant 12 : index
    %138 = memref.load %arg8[%c12] : memref<16xf32, #tpu.memory_space<smem>>
    %139 = vector.broadcast %138 : f32 to vector<8x128xf32>
    %140 = arith.mulf %139, %137 : vector<8x128xf32>
    %141 = arith.addf %131, %140 : vector<8x128xf32>
    %142 = vector.extract_strided_slice %6 {offsets = [0, 13], sizes = [8, 1], strides = [1, 1]} : vector<8x16xf32> to vector<8x1xf32>
    %143 = vector.extract_strided_slice %10 {offsets = [13, 0], sizes = [1, 128], strides = [1, 1]} : vector<16x128xf32> to vector<1x128xf32>
    %144 = vector.broadcast %142 : vector<8x1xf32> to vector<8x128xf32>
    %145 = vector.broadcast %143 : vector<1x128xf32> to vector<8x128xf32>
    %146 = arith.addf %144, %145 : vector<8x128xf32>
    %147 = math.tanh %146 : vector<8x128xf32>
    %c13 = arith.constant 13 : index
    %148 = memref.load %arg8[%c13] : memref<16xf32, #tpu.memory_space<smem>>
    %149 = vector.broadcast %148 : f32 to vector<8x128xf32>
    %150 = arith.mulf %149, %147 : vector<8x128xf32>
    %151 = arith.addf %141, %150 : vector<8x128xf32>
    %152 = vector.extract_strided_slice %6 {offsets = [0, 14], sizes = [8, 1], strides = [1, 1]} : vector<8x16xf32> to vector<8x1xf32>
    %153 = vector.extract_strided_slice %10 {offsets = [14, 0], sizes = [1, 128], strides = [1, 1]} : vector<16x128xf32> to vector<1x128xf32>
    %154 = vector.broadcast %152 : vector<8x1xf32> to vector<8x128xf32>
    %155 = vector.broadcast %153 : vector<1x128xf32> to vector<8x128xf32>
    %156 = arith.addf %154, %155 : vector<8x128xf32>
    %157 = math.tanh %156 : vector<8x128xf32>
    %c14 = arith.constant 14 : index
    %158 = memref.load %arg8[%c14] : memref<16xf32, #tpu.memory_space<smem>>
    %159 = vector.broadcast %158 : f32 to vector<8x128xf32>
    %160 = arith.mulf %159, %157 : vector<8x128xf32>
    %161 = arith.addf %151, %160 : vector<8x128xf32>
    %162 = vector.extract_strided_slice %6 {offsets = [0, 15], sizes = [8, 1], strides = [1, 1]} : vector<8x16xf32> to vector<8x1xf32>
    %163 = vector.extract_strided_slice %10 {offsets = [15, 0], sizes = [1, 128], strides = [1, 1]} : vector<16x128xf32> to vector<1x128xf32>
    %164 = vector.broadcast %162 : vector<8x1xf32> to vector<8x128xf32>
    %165 = vector.broadcast %163 : vector<1x128xf32> to vector<8x128xf32>
    %166 = arith.addf %164, %165 : vector<8x128xf32>
    %167 = math.tanh %166 : vector<8x128xf32>
    %c15 = arith.constant 15 : index
    %168 = memref.load %arg8[%c15] : memref<16xf32, #tpu.memory_space<smem>>
    %169 = vector.broadcast %168 : f32 to vector<8x128xf32>
    %170 = arith.mulf %169, %167 : vector<8x128xf32>
    %171 = arith.addf %161, %170 : vector<8x128xf32>
    %c0_14 = arith.constant 0 : index
    %c0_15 = arith.constant 0 : index
    %c0_16 = arith.constant 0 : index
    %172 = vector.load %arg9[%c0_14, %c0_15, %c0_16] : memref<1x8x128xf32, #tpu.memory_space<vmem>>, vector<1x8x128xf32>
    %173 = vector.shape_cast %172 : vector<1x8x128xf32> to vector<8x128xf32>
    %174 = vector.shape_cast %171 : vector<8x128xf32> to vector<1x8x128xf32>
    tpu.vector_store %arg9[%c0_14, %c0_15, %c0_16], %174 {strides = array<i32>} : memref<1x8x128xf32, #tpu.memory_space<vmem>>, vector<1x8x128xf32>,
    return
  }
  func.func @transform_0(%arg0: i32, %arg1: i32, %arg2: i32) -> (i32, i32, i32) {
    %c0_i32 = arith.constant 0 : i32
    %c0_i32_0 = arith.constant 0 : i32
    return %arg0, %arg1, %c0_i32 : i32, i32, i32
  }
  func.func @transform_1(%arg0: i32, %arg1: i32, %arg2: i32) -> (i32, i32, i32) {
    %c0_i32 = arith.constant 0 : i32
    %c0_i32_0 = arith.constant 0 : i32
    return %arg0, %c0_i32, %arg2 : i32, i32, i32
  }
  func.func @transform_2(%arg0: i32, %arg1: i32, %arg2: i32) -> (i32, i32) {
    %c0_i32 = arith.constant 0 : i32
    %c0_i32_0 = arith.constant 0 : i32
    %c0_i32_1 = arith.constant 0 : i32
    return %c0_i32, %c0_i32_0 : i32, i32
  }
  func.func @transform_3(%arg0: i32, %arg1: i32, %arg2: i32) -> (i32, i32) {
    %c0_i32 = arith.constant 0 : i32
    %c0_i32_0 = arith.constant 0 : i32
    %c0_i32_1 = arith.constant 0 : i32
    return %c0_i32, %c0_i32_0 : i32, i32
  }
  func.func @transform_4(%arg0: i32, %arg1: i32, %arg2: i32) -> (i32, i32) {
    %c0_i32 = arith.constant 0 : i32
    %c0_i32_0 = arith.constant 0 : i32
    %c0_i32_1 = arith.constant 0 : i32
    return %c0_i32, %c0_i32_0 : i32, i32
  }
  func.func @transform_5(%arg0: i32, %arg1: i32, %arg2: i32) -> i32 {
    %c0_i32 = arith.constant 0 : i32
    %c0_i32_0 = arith.constant 0 : i32
    return %c0_i32 : i32
  }
  func.func @transform_6(%arg0: i32, %arg1: i32, %arg2: i32) -> (i32, i32, i32) {
    %c0_i32 = arith.constant 0 : i32
    return %arg0, %arg1, %arg2 : i32, i32, i32
  }
}

</mosaic_0001>

<llo_original>
// kernel: tpu_custom_call.1
$region0: #{tpu_custom_call.1}
  #allocation0 [shape = 'u32[]', space=smem, size = 0x4, offset = 0x4, fixed_abs, tag = 'smem constant byte address 0x4 - core index']
  #allocation1 [shape = 'u32[144,128]{1,0:T(1,128)}', space=vmem, size = 0x12000, scoped, tag = 'internal scratch']
  %s0 = inlined_call_operand.vmem [shape: f32[2,8,32], index: 0, kind: input, shape index: {}]
  %s1 = inlined_call_operand.hbm [shape: f32[2,32,128], index: 1, kind: input, shape index: {}]
  %s2 = inlined_call_operand.vmem [shape: f32[32,16], index: 2, kind: input, shape index: {}]
  %s3 = inlined_call_operand.vmem [shape: f32[16,32], index: 3, kind: input, shape index: {}]
  %s4 = inlined_call_operand.vmem [shape: f32[1,16], index: 4, kind: input, shape index: {}]
  %s5 = inlined_call_operand.vmem [shape: f32[16], index: 5, kind: input, shape index: {}]
  %s6 = inlined_call_operand.hbm [shape: f32[2,8,128], index: 6, kind: output, shape index: {}]
  %s7 = sld [smem:[#allocation0]]
  $region65: #{tpu_custom_call.1} parent=0
    _
  %s9 = ssub.s32 1, %s7
  %s10 = scalar_select 0, %s9, %s7
  $region1: #{tpu_custom_call.1} parent=0
    #allocation2 [shape = 'u8[32768]{0}', space=vmem, size = 0x8000, scoped, tag = 'input window, operand 1']
    #allocation3 [shape = 's32[2]{0}', space=sflag, size = 0x8, scoped, tag = 'scoped memory for tpu_custom_call.1']
    #allocation4 [shape = 's32[2]{0}', space=sflag, size = 0x8, scoped, tag = 'scoped memory for tpu_custom_call.1']
    #allocation5 [shape = 's32[2]{0}', space=sflag, size = 0x8, scoped, tag = 'scoped memory for tpu_custom_call.1']
    #allocation6 [shape = 'u8[512]{0}', space=smem, size = 0x200, scoped, tag = 'input window, operand 5, single buffered']
    #allocation7 [shape = 'u8[8192]{0}', space=vmem, size = 0x2000, scoped, tag = 'output window, operand 0']
    %11 = vsyncpa [#allocation3], 0
    %s12 = scalar_lea.sflag [#allocation3], 1
    %13 = vsyncpa %s12, 0
    %14 = vsyncpa [#allocation5], 0
    %15 = vsyncpa [#allocation4], 0
    %s16 = scalar_lea.sflag [#allocation4], 1
    %17 = vsyncpa %s16, 0
    loop: start=0, step=1, limit=4
    $region2: #{tpu_custom_call.1} parent=1 // loop_pre_header
      _
    $region3: #{tpu_custom_call.1} parent=1 // loop_header
      %s19 = sphi 0, %s23
      %p20 = scmp.ge.s32.totalorder %s19, 4
      %s26 = sphi 0, %s45
      %s27 = sphi 0, %s41
      %s28 = sphi 0, %s37
      %s29 = sphi 0, %s26
      %s30 = sphi 0, %s27
      %s31 = sphi 0, %s28
      %s32 = sphi 0, %s29
      %s33 = sphi 0, %s30
      %s34 = sphi 0, %s31
      %s50 = sphi 0, %s52
      %s53 = sphi 0, %s50
      %s54 = sphi 0, %s53
      %s70 = sphi 0, %s54
      %s78 = sphi 0, %s80
      %s81 = sphi 0, %s78
      %s82 = sphi 0, %s81
      %s98 = sphi 0, %s82
      %s102 = sphi 0, %s102
      %s104 = sphi 0, %s102
      %s105 = sphi 0, %s104
      %s119 = sphi 0, %s105
      %s123 = sphi 0, %s123
      %s125 = sphi 0, %s123
      %s126 = sphi 0, %s125
      %s140 = sphi 0, %s126
      %s144 = sphi 0, %s144
      %s146 = sphi 0, %s144
      %s147 = sphi 0, %s146
      %s161 = sphi 0, %s147
      %s165 = sphi 0, %s165
      %s167 = sphi 0, %s165
      %s168 = sphi 0, %s167
      %s182 = sphi 0, %s168
      %s192 = sphi 0, %s194
      %s195 = sphi 0, %s192
      %s196 = sphi 0, %s195
      %s212 = sphi 0, %s196
    $region4: #{tpu_custom_call.1} parent=1 // loop_header_branch
      %22 = sbr.rel (%p20) target = $region8
    $region5: #{tpu_custom_call.1} parent=1 // loop_body
      %s24 = ssub.s32 %s19, 1
      %s25 = ssub.s32 %s19, 2
      %s35 = sadd.s32 1, %s28
      %p36 = scmp.ge.s32.totalorder %s35, 1
      %s37 = scalar_select %p36, 0, %s35
      %s38 = sadd.s32 1, %s27
      %s39 = scalar_select %p36, %s38, %s27
      %p40 = scmp.ge.s32.totalorder %s39, 1
      %s41 = scalar_select %p40, 0, %s39
      %s42 = sadd.s32 1, %s26
      %s43 = scalar_select %p40, %s42, %s26
      %p44 = scmp.ge.s32.totalorder %s43, 2
      %s45 = scalar_select %p44, 0, %s43
      %s46 = ssub.s32 %s26, %s45
      %s47 = ssub.s32 %s27, %s41
      %s48 = sor.u32 %s46, %s47
      %p49 = scmp.eq.s32.totalorder %s48, 0
      %s51 = sadd.s32 %s50, 1
      %s52 = scalar_select %p49, %s50, %s51
      %p55 = pneg %p49
      %p56 = scmp.eq.s32.totalorder %s19, 1
      %p57 = por %p55, %p56
      %p58 = scmp.ne.s32.totalorder %s50, %s53
      %p59 = scmp.eq.s32.totalorder %s19, 0
      %p60 = por %p58, %p59
      %p61 = scmp.ne.s32.totalorder %s50, %s53
      %p62 = scmp.eq.s32.totalorder %s24, 1
      %p63 = por %p61, %p62
      %p64 = scmp.ne.s32.totalorder %s53, %s54
      %p65 = scmp.eq.s32.totalorder %s24, 0
      %p66 = por %p64, %p65
      %p67 = scmp.ne.s32.totalorder %s53, %s54
      %p68 = scmp.eq.s32.totalorder %s25, 1
      %p69 = por %p67, %p68
      %p71 = scmp.ne.s32.totalorder %s54, %s70
      %p72 = scmp.eq.s32.totalorder %s25, 0
      %p73 = por %p71, %p72
      %s74 = ssub.s32 %s26, %s45
      %s75 = ssub.s32 %s28, %s37
      %s76 = sor.u32 %s74, %s75
      %p77 = scmp.eq.s32.totalorder %s76, 0
      %s79 = sadd.s32 %s78, 1
      %s80 = scalar_select %p77, %s78, %s79
      %p83 = pneg %p77
      %p84 = scmp.eq.s32.totalorder %s19, 1
      %p85 = por %p83, %p84
      %p86 = scmp.ne.s32.totalorder %s78, %s81
      %p87 = scmp.eq.s32.totalorder %s19, 0
      %p88 = por %p86, %p87
      %p89 = scmp.ne.s32.totalorder %s78, %s81
      %p90 = scmp.eq.s32.totalorder %s24, 1
      %p91 = por %p89, %p90
      %p92 = scmp.ne.s32.totalorder %s81, %s82
      %p93 = scmp.eq.s32.totalorder %s24, 0
      %p94 = por %p92, %p93
      %p95 = scmp.ne.s32.totalorder %s81, %s82
      %p96 = scmp.eq.s32.totalorder %s25, 1
      %p97 = por %p95, %p96
      %p99 = scmp.ne.s32.totalorder %s82, %s98
      %p100 = scmp.eq.s32.totalorder %s25, 0
      %p101 = por %p99, %p100
      %s103 = sadd.s32 %s102, 1
      %p106 = scmp.eq.s32.totalorder %s19, 1
      %p107 = scmp.ne.s32.totalorder %s102, %s104
      %p108 = scmp.eq.s32.totalorder %s19, 0
      %p109 = por %p107, %p108
      %p110 = scmp.ne.s32.totalorder %s102, %s104
      %p111 = scmp.eq.s32.totalorder %s24, 1
      %p112 = por %p110, %p111
      %p113 = scmp.ne.s32.totalorder %s104, %s105
      %p114 = scmp.eq.s32.totalorder %s24, 0
      %p115 = por %p113, %p114
      %p116 = scmp.ne.s32.totalorder %s104, %s105
      %p117 = scmp.eq.s32.totalorder %s25, 1
      %p118 = por %p116, %p117
      %p120 = scmp.ne.s32.totalorder %s105, %s119
      %p121 = scmp.eq.s32.totalorder %s25, 0
      %p122 = por %p120, %p121
      %s124 = sadd.s32 %s123, 1
      %p127 = scmp.eq.s32.totalorder %s19, 1
      %p128 = scmp.ne.s32.totalorder %s123, %s125
      %p129 = scmp.eq.s32.totalorder %s19, 0
      %p130 = por %p128, %p129
      %p131 = scmp.ne.s32.totalorder %s123, %s125
      %p132 = scmp.eq.s32.totalorder %s24, 1
      %p133 = por %p131, %p132
      %p134 = scmp.ne.s32.totalorder %s125, %s126
      %p135 = scmp.eq.s32.totalorder %s24, 0
      %p136 = por %p134, %p135
      %p137 = scmp.ne.s32.totalorder %s125, %s126
      %p138 = scmp.eq.s32.totalorder %s25, 1
      %p139 = por %p137, %p138
      %p141 = scmp.ne.s32.totalorder %s126, %s140
      %p142 = scmp.eq.s32.totalorder %s25, 0
      %p143 = por %p141, %p142
      %s145 = sadd.s32 %s144, 1
      %p148 = scmp.eq.s32.totalorder %s19, 1
      %p149 = scmp.ne.s32.totalorder %s144, %s146
      %p150 = scmp.eq.s32.totalorder %s19, 0
      %p151 = por %p149, %p150
      %p152 = scmp.ne.s32.totalorder %s144, %s146
      %p153 = scmp.eq.s32.totalorder %s24, 1
      %p154 = por %p152, %p153
      %p155 = scmp.ne.s32.totalorder %s146, %s147
      %p156 = scmp.eq.s32.totalorder %s24, 0
      %p157 = por %p155, %p156
      %p158 = scmp.ne.s32.totalorder %s146, %s147
      %p159 = scmp.eq.s32.totalorder %s25, 1
      %p160 = por %p158, %p159
      %p162 = scmp.ne.s32.totalorder %s147, %s161
      %p163 = scmp.eq.s32.totalorder %s25, 0
      %p164 = por %p162, %p163
      %s166 = sadd.s32 %s165, 1
      %p169 = scmp.eq.s32.totalorder %s19, 1
      %p170 = scmp.ne.s32.totalorder %s165, %s167
      %p171 = scmp.eq.s32.totalorder %s19, 0
      %p172 = por %p170, %p171
      %p173 = scmp.ne.s32.totalorder %s165, %s167
      %p174 = scmp.eq.s32.totalorder %s24, 1
      %p175 = por %p173, %p174
      %p176 = scmp.ne.s32.totalorder %s167, %s168
      %p177 = scmp.eq.s32.totalorder %s24, 0
      %p178 = por %p176, %p177
      %p179 = scmp.ne.s32.totalorder %s167, %s168
      %p180 = scmp.eq.s32.totalorder %s25, 1
      %p181 = por %p179, %p180
      %p183 = scmp.ne.s32.totalorder %s168, %s182
      %p184 = scmp.eq.s32.totalorder %s25, 0
      %p185 = por %p183, %p184
      %s186 = ssub.s32 %s26, %s45
      %s187 = ssub.s32 %s27, %s41
      %s188 = sor.u32 %s186, %s187
      %s189 = ssub.s32 %s28, %s37
      %s190 = sor.u32 %s188, %s189
      %p191 = scmp.eq.s32.totalorder %s190, 0
      %s193 = sadd.s32 %s192, 1
      %s194 = scalar_select %p191, %s192, %s193
      %p197 = pneg %p191
      %p198 = scmp.eq.s32.totalorder %s19, 1
      %p199 = por %p197, %p198
      %p200 = scmp.ne.s32.totalorder %s192, %s195
      %p201 = scmp.eq.s32.totalorder %s19, 0
      %p202 = por %p200, %p201
      %p203 = scmp.ne.s32.totalorder %s192, %s195
      %p204 = scmp.eq.s32.totalorder %s24, 1
      %p205 = por %p203, %p204
      %p206 = scmp.ne.s32.totalorder %s195, %s196
      %p207 = scmp.eq.s32.totalorder %s24, 0
      %p208 = por %p206, %p207
      %p209 = scmp.ne.s32.totalorder %s195, %s196
      %p210 = scmp.eq.s32.totalorder %s25, 1
      %p211 = por %p209, %p210
      %p213 = scmp.ne.s32.totalorder %s196, %s212
      %p214 = scmp.eq.s32.totalorder %s25, 0
      %p215 = por %p213, %p214
      %p216 = scmp.le.s32.totalorder 1, %s19
      %p217 = scmp.lt.s32.totalorder %s19, 3
      %p218 = pnand %p216, %p217
      %p219 = pneg %p218
      // Predicated region
      $region9: #{tpu_custom_call.1} parent=5 // pred_check
        _
      $region10: #{tpu_custom_call.1} parent=5 // pred_check_branch
        %221 = sbr.rel (%p218) target = $region12
      $region11: #{tpu_custom_call.1} parent=5 // pred_region
        %s222 = ssub.s32 %s19, 1
        // Predicated region
        $region13: #{tpu_custom_call.1} parent=11 // pred_check
          %p223 = pneg %p115
        $region14: #{tpu_custom_call.1} parent=11 // pred_check_branch
          %225 = sbr.rel (%p223) target = $region16
        $region15: #{tpu_custom_call.1} parent=11 // pred_region
          _
        $region16: #{tpu_custom_call.1} parent=11 // pred_fallthru
          _
        // Predicated region
        $region17: #{tpu_custom_call.1} parent=11 // pred_check
          %p226 = pneg %p136
        $region18: #{tpu_custom_call.1} parent=11 // pred_check_branch
          %228 = sbr.rel (%p226) target = $region20
        $region19: #{tpu_custom_call.1} parent=11 // pred_region
          _
        $region20: #{tpu_custom_call.1} parent=11 // pred_fallthru
          _
        // Predicated region
        $region21: #{tpu_custom_call.1} parent=11 // pred_check
          %p229 = pneg %p157
        $region22: #{tpu_custom_call.1} parent=11 // pred_check_branch
          %231 = sbr.rel (%p229) target = $region24
        $region23: #{tpu_custom_call.1} parent=11 // pred_region
          _
        $region24: #{tpu_custom_call.1} parent=11 // pred_fallthru
          _
        // Predicated region
        $region25: #{tpu_custom_call.1} parent=11 // pred_check
          %p232 = pneg %p178
        $region26: #{tpu_custom_call.1} parent=11 // pred_check_branch
          %234 = sbr.rel (%p232) target = $region28
        $region27: #{tpu_custom_call.1} parent=11 // pred_region
          %s236 = ssub.s32 16, 16
          %237 = vsyncadd [#allocation5], %s236
          %s239 = sshll.u32 %s5, 4
          %s240 = int_to_ptr.vmem [resolvable:$true] %s239
          %242 = dma.vmem_to_smem %s240, 16, [#allocation6], [#allocation5]
        $region28: #{tpu_custom_call.1} parent=11 // pred_fallthru
          _
      $region12: #{tpu_custom_call.1} parent=5 // pred_fallthru
        _
      %p243 = scmp.lt.s32.totalorder %s19, 2
      // Predicated region
      $region29: #{tpu_custom_call.1} parent=5 // pred_check
        %p244 = pneg %p243
      $region30: #{tpu_custom_call.1} parent=5 // pred_check_branch
        %246 = sbr.rel (%p244) target = $region32
      $region31: #{tpu_custom_call.1} parent=5 // pred_region
        // Predicated region
        $region33: #{tpu_custom_call.1} parent=31 // pred_check
          %p247 = pneg %p60
        $region34: #{tpu_custom_call.1} parent=31 // pred_check_branch
          %249 = sbr.rel (%p247) target = $region36
        $region35: #{tpu_custom_call.1} parent=31 // pred_region
          %p250 = scmp.lt.s32.totalorder %s26, 1
          %s251 = scalar_select %p250, %s26, 1
          %p252 = scmp.lt.s32.totalorder %s27, 0
          %s253 = scalar_select %p252, %s27, 0
          %s254 = sadd.s32 %s253, %s251
          %s255 = smul.addr %s254, 8
          %s256 = scalar_lea.vmem %s0, %s255
        $region36: #{tpu_custom_call.1} parent=31 // pred_fallthru
          _
        // Predicated region
        $region37: #{tpu_custom_call.1} parent=31 // pred_check
          %p257 = pneg %p88
        $region38: #{tpu_custom_call.1} parent=31 // pred_check_branch
          %259 = sbr.rel (%p257) target = $region40
        $region39: #{tpu_custom_call.1} parent=31 // pred_region
          %s260 = sand.u32 %s78, 1
          %s261 = scalar_lea.sflag [#allocation3], %s260
          %s262 = sand.u32 %s78, 1
          %s263 = smul.addr %s262, 32
          %s264 = scalar_lea.vmem [#allocation2], %s263
          %s266 = ssub.s32 512, 512
          %267 = vsyncadd %s261, %s266
          %s268 = smul.addr %s26, 4
          %s269 = sadd.s32 %s28, %s268
          %s270 = smul.addr %s269, 128
          %s271 = scalar_lea.hbm %s1, %s270
          %s272 = sshll.u32 %s264, 4
          %s273 = int_to_ptr.vmem [resolvable:$true] %s272
          %278 = dma.hbm_to_vmem [thread:$0]  %s271, 512, %s273, %s261, 128, 128, 8
        $region40: #{tpu_custom_call.1} parent=31 // pred_fallthru
          _
      $region32: #{tpu_custom_call.1} parent=5 // pred_fallthru
        _
      %p279 = scmp.le.s32.totalorder 1, %s19
      %p280 = scmp.lt.s32.totalorder %s19, 3
      %p281 = pnand %p279, %p280
      %p282 = pneg %p281
      // Predicated region
      $region41: #{tpu_custom_call.1} parent=5 // pred_check
        _
      $region42: #{tpu_custom_call.1} parent=5 // pred_check_branch
        %284 = sbr.rel (%p281) target = $region44
      $region43: #{tpu_custom_call.1} parent=5 // pred_region
        %s285 = ssub.s32 %s19, 1
        %s286 = sand.u32 %s81, 1
        %s287 = scalar_lea.sflag [#allocation3], %s286
        %s288 = sand.u32 %s81, 1
        %s289 = smul.addr %s288, 32
        %s290 = scalar_lea.vmem [#allocation2], %s289
        // Predicated region
        $region45: #{tpu_custom_call.1} parent=43 // pred_check
          %p291 = pneg %p94
        $region46: #{tpu_custom_call.1} parent=43 // pred_check_branch
          %293 = sbr.rel (%p291) target = $region48
        $region47: #{tpu_custom_call.1} parent=43 // pred_region
          %294 = dma.done %s287, 512
        $region48: #{tpu_custom_call.1} parent=43 // pred_fallthru
          _
        // Predicated region
        $region49: #{tpu_custom_call.1} parent=43 // pred_check
          %p295 = pneg %p178
        $region50: #{tpu_custom_call.1} parent=43 // pred_check_branch
          %297 = sbr.rel (%p295) target = $region52
        $region51: #{tpu_custom_call.1} parent=43 // pred_region
          %298 = dma.done [#allocation5], 16
        $region52: #{tpu_custom_call.1} parent=43 // pred_fallthru
          _
        %299 = sfence
        %p300 = scmp.lt.s32.totalorder %s29, 1
        %s301 = scalar_select %p300, %s29, 1
        %p302 = scmp.lt.s32.totalorder %s30, 0
        %s303 = scalar_select %p302, %s30, 0
        %s304 = sadd.s32 %s303, %s301
        %s305 = smul.addr %s304, 8
        %s306 = scalar_lea.vmem %s0, %s305
        %p307 = pneg %p66
        %p308 = pneg %p63
        %s309 = sand.u32 %s81, 1
        %s310 = scalar_lea.sflag [#allocation3], %s309
        %s311 = sand.u32 %s81, 1
        %s312 = smul.addr %s311, 32
        %s313 = scalar_lea.vmem [#allocation2], %s312
        %p314 = pneg %p94
        %p315 = pneg %p91
        %p316 = pneg %p115
        %p317 = pneg %p112
        %p318 = pneg %p136
        %p319 = pneg %p133
        %p320 = pneg %p157
        %p321 = pneg %p154
        %p322 = pneg %p178
        %p323 = pneg %p175
        %p324 = pneg %p208
        %p325 = pneg %p205
        %s326 = sand.u32 %s195, 1
        %s327 = scalar_lea.sflag [#allocation4], %s326
        %s328 = sand.u32 %s195, 1
        %s329 = smul.addr %s328, 8
        %s330 = scalar_lea.vmem [#allocation7], %s329
        %p331 = scmp.lt.s32.totalorder %s29, 1
        %s332 = scalar_select %p331, %s29, 1
        %p333 = scmp.lt.s32.totalorder %s30, 0
        %s334 = scalar_select %p333, %s30, 0
        %s335 = sadd.s32 %s334, %s332
        %s336 = smul.addr %s335, 8
        %s337 = scalar_lea.vmem %s0, %s336
        %v338 = vld [vmem:[%s337] sm:$0xff]
        %v339 = vld [vmem:[%s2] sm:$0xff]
        %v340 = vld [vmem:[%s2 + $0x8] sm:$0xff]
        %v341 = vld [vmem:[%s2 + $0x10] sm:$0xff]
        %v342 = vld [vmem:[%s2 + $0x18] sm:$0xff]
        %v343 = vld [vmem:[%s4] sm:$0x1]
        %v345 = vlaneseq
        %v346 = vshrl.u32 %v345, 7
        %v347 = vsub.s32 0, %v346
        %v348 = vrot.slane %v343, %v347
        %vm350 = vcmask 261120
        %v352 = vsel %vm350, %v338, 0
        %354 = vmatprep.subr.mxu0 0.0
        %355 = vmatpush1.msra.mxu0 %v339
        %356 = vmatprep.subr.mxu0 0.0
        %357 = vmatpush1.msra.mxu0 %v340
        %358 = vmatprep.subr.mxu0 0.0
        %359 = vmatpush1.msra.mxu0 %v341
        %360 = vmatprep.subr.mxu0 0.0
        %361 = vmatpush1.msra.mxu0 %v342
        %362 = vmatprep.subr.mxu0 0.0
        %363 = vmatpush1.msra.mxu0 0.0
        %364 = vmatprep.subr.mxu0 0.0
        %365 = vmatpush1.msra.mxu0 0.0
        %366 = vmatprep.subr.mxu0 0.0
        %367 = vmatpush1.msra.mxu0 0.0
        %368 = vmatprep.subr.mxu0 0.0
        %369 = vmatpush1.msra.mxu0 0.0
        %370 = vmatprep.subr.mxu0 0.0
        %371 = vmatpush1.msra.mxu0 0.0
        %372 = vmatprep.subr.mxu0 0.0
        %373 = vmatpush1.msra.mxu0 0.0
        %374 = vmatprep.subr.mxu0 0.0
        %375 = vmatpush1.msra.mxu0 0.0
        %376 = vmatprep.subr.mxu0 0.0
        %377 = vmatpush1.msra.mxu0 0.0
        %378 = vmatprep.subr.mxu0 0.0
        %379 = vmatpush1.msra.mxu0 0.0
        %380 = vmatprep.subr.mxu0 0.0
        %381 = vmatpush1.msra.mxu0 0.0
        %382 = vmatprep.subr.mxu0 0.0
        %383 = vmatpush1.msra.mxu0 0.0
        %384 = vmatprep.subr.mxu0 0.0
        %385 = vmatpush1.msra.mxu0 0.0
        %386 = vmatprep.subr.mxu0 0.0
        %387 = vmatpush1.msra.mxu0 0.0
        %388 = vmatprep.subr.mxu0 0.0
        %389 = vmatpush1.msra.mxu0 0.0
        %390 = vmatprep.subr.mxu0 0.0
        %391 = vmatpush1.msra.mxu0 0.0
        %392 = vmatprep.subr.mxu0 0.0
        %393 = vmatpush1.msra.mxu0 0.0
        %394 = vmatprep.subr.mxu0 0.0
        %395 = vmatpush1.msra.mxu0 0.0
        %396 = vmatprep.subr.mxu0 0.0
        %397 = vmatpush1.msra.mxu0 0.0
        %398 = vmatprep.subr.mxu0 0.0
        %399 = vmatpush1.msra.mxu0 0.0
        %400 = vmatprep.subr.mxu0 0.0
        %401 = vmatpush1.msra.mxu0 0.0
        %402 = vmatprep.subr.mxu0 0.0
        %403 = vmatpush1.msra.mxu0 0.0
        %404 = vmatprep.subr.mxu0 0.0
        %405 = vmatpush1.msra.mxu0 0.0
        %406 = vmatprep.subr.mxu0 0.0
        %407 = vmatpush1.msra.mxu0 0.0
        %408 = vmatprep.subr.mxu0 0.0
        %409 = vmatpush1.msra.mxu0 0.0
        %410 = vmatprep.subr.mxu0 0.0
        %411 = vmatpush1.msra.mxu0 0.0
        %412 = vmatprep.subr.mxu0 0.0
        %413 = vmatpush1.msra.mxu0 0.0
        %414 = vmatprep.subr.mxu0 0.0
        %415 = vmatpush1.msra.mxu0 0.0
        %416 = vmatprep.subr.mxu0 0.0
        %417 = vmatpush1.msra.mxu0 0.0
        %418 = vmatprep.mubr.f32.mxu0 0.0
        %419 = vmatmul.mubr.f32.gmra.mrb[0].mxu0 %v352
        %v420 = vpop.f32.mrb[0].mxu0
        %v421 = vadd.f32 %v348, %v420
        %v422 = vpop.f32.mrb[0].mxu0
        %423 = vdwg.mxu0
        %v424 = vld [vmem:[%s3] sm:$0xff]
        %v425 = vld [vmem:[%s3 + $0x8] sm:$0xff]
        %v426 = vld [vmem:[%s290] sm:$0xff]
        %v427 = vld [vmem:[%s290 + $0x8] sm:$0xff]
        %v428 = vld [vmem:[%s290 + $0x10] sm:$0xff]
        %v429 = vld [vmem:[%s290 + $0x18] sm:$0xff]
        %v431 = vsel %vm350, %v424, 0
        %v434 = vsel %vm350, %v425, 0
        %436 = vmatprep.subr.mxu0 0.0
        %437 = vmatpush1.msra.mxu0 %v426
        %438 = vmatprep.subr.mxu0 0.0
        %439 = vmatpush1.msra.mxu0 %v427
        %440 = vmatprep.subr.mxu0 0.0
        %441 = vmatpush1.msra.mxu0 %v428
        %442 = vmatprep.subr.mxu0 0.0
        %443 = vmatpush1.msra.mxu0 %v429
        %444 = vmatprep.subr.mxu0 0.0
        %445 = vmatpush1.msra.mxu0 0.0
        %446 = vmatprep.subr.mxu0 0.0
        %447 = vmatpush1.msra.mxu0 0.0
        %448 = vmatprep.subr.mxu0 0.0
        %449 = vmatpush1.msra.mxu0 0.0
        %450 = vmatprep.subr.mxu0 0.0
        %451 = vmatpush1.msra.mxu0 0.0
        %452 = vmatprep.subr.mxu0 0.0
        %453 = vmatpush1.msra.mxu0 0.0
        %454 = vmatprep.subr.mxu0 0.0
        %455 = vmatpush1.msra.mxu0 0.0
        %456 = vmatprep.subr.mxu0 0.0
        %457 = vmatpush1.msra.mxu0 0.0
        %458 = vmatprep.subr.mxu0 0.0
        %459 = vmatpush1.msra.mxu0 0.0
        %460 = vmatprep.subr.mxu0 0.0
        %461 = vmatpush1.msra.mxu0 0.0
        %462 = vmatprep.subr.mxu0 0.0
        %463 = vmatpush1.msra.mxu0 0.0
        %464 = vmatprep.subr.mxu0 0.0
        %465 = vmatpush1.msra.mxu0 0.0
        %466 = vmatprep.subr.mxu0 0.0
        %467 = vmatpush1.msra.mxu0 0.0
        %468 = vmatprep.subr.mxu0 0.0
        %469 = vmatpush1.msra.mxu0 0.0
        %470 = vmatprep.subr.mxu0 0.0
        %471 = vmatpush1.msra.mxu0 0.0
        %472 = vmatprep.subr.mxu0 0.0
        %473 = vmatpush1.msra.mxu0 0.0
        %474 = vmatprep.subr.mxu0 0.0
        %475 = vmatpush1.msra.mxu0 0.0
        %476 = vmatprep.subr.mxu0 0.0
        %477 = vmatpush1.msra.mxu0 0.0
        %478 = vmatprep.subr.mxu0 0.0
        %479 = vmatpush1.msra.mxu0 0.0
        %480 = vmatprep.subr.mxu0 0.0
        %481 = vmatpush1.msra.mxu0 0.0
        %482 = vmatprep.subr.mxu0 0.0
        %483 = vmatpush1.msra.mxu0 0.0
        %484 = vmatprep.subr.mxu0 0.0
        %485 = vmatpush1.msra.mxu0 0.0
        %486 = vmatprep.subr.mxu0 0.0
        %487 = vmatpush1.msra.mxu0 0.0
        %488 = vmatprep.subr.mxu0 0.0
        %489 = vmatpush1.msra.mxu0 0.0
        %490 = vmatprep.subr.mxu0 0.0
        %491 = vmatpush1.msra.mxu0 0.0
        %492 = vmatprep.subr.mxu0 0.0
        %493 = vmatpush1.msra.mxu0 0.0
        %494 = vmatprep.subr.mxu0 0.0
        %495 = vmatpush1.msra.mxu0 0.0
        %496 = vmatprep.subr.mxu0 0.0
        %497 = vmatpush1.msra.mxu0 0.0
        %498 = vmatprep.subr.mxu0 0.0
        %499 = vmatpush1.msra.mxu0 0.0
        %500 = vmatprep.mubr.f32.mxu0 0.0
        %501 = vmatmul.mubr.f32.gmra.mrb[0].mxu0 %v431
        %v502 = vpop.f32.mrb[0].mxu0
        %v503 = vadd.f32 0.0, %v502
        %v504 = vpop.f32.mrb[0].mxu0
        %505 = vmatprep.mubr.f32.mxu0 0.0
        %506 = vmatmul.mubr.f32.gmra.mrb[0].mxu0 %v434
        %v507 = vpop.f32.mrb[0].mxu0
        %v508 = vadd.f32 0.0, %v507
        %v509 = vpop.f32.mrb[0].mxu0
        %510 = vdwg.mxu0
        %512 = vset.pattern.permute.xlu0 0
        %513 = vperm.xlu0 %512, %v421
        %v514 = vpop.permute.xlu0 %513
        %v516 = vlaneseq
        %v517 = vshrl.u32 %v516, 7
        %v518 = vsub.s32 0, %v517
        %v519 = vrot.slane %v503, %v518
        %v520 = vadd.f32 %v514, %v519
        %v521 = vtanh.pop %v520
        %s522 = sld [smem:[#allocation6]]
        %v523 = vstv %s522
        %v524 = vmul.f32 %v523, %v521
        %v525 = vadd.f32 %v524, 0.0
        %526 = vset.pattern.permute.xlu0 1
        %527 = vperm.xlu0 %526, %v421
        %v528 = vpop.permute.xlu0 %527
        %v530 = vlaneseq
        %v531 = vshrl.u32 %v530, 7
        %v532 = vsub.s32 1, %v531
        %v533 = vrot.slane %v503, %v532
        %v534 = vadd.f32 %v528, %v533
        %v535 = vtanh.pop %v534
        %s536 = sld [smem:[#allocation6 + $0x1]]
        %v537 = vstv %s536
        %v538 = vmul.f32 %v537, %v535
        %v539 = vadd.f32 %v525, %v538
        %540 = vset.pattern.permute.xlu0 2
        %541 = vperm.xlu0 %540, %v421
        %v542 = vpop.permute.xlu0 %541
        %v544 = vlaneseq
        %v545 = vshrl.u32 %v544, 7
        %v546 = vsub.s32 2, %v545
        %v547 = vrot.slane %v503, %v546
        %v548 = vadd.f32 %v542, %v547
        %v549 = vtanh.pop %v548
        %s550 = sld [smem:[#allocation6 + $0x2]]
        %v551 = vstv %s550
        %v552 = vmul.f32 %v551, %v549
        %v553 = vadd.f32 %v539, %v552
        %554 = vset.pattern.permute.xlu0 3
        %555 = vperm.xlu0 %554, %v421
        %v556 = vpop.permute.xlu0 %555
        %v558 = vlaneseq
        %v559 = vshrl.u32 %v558, 7
        %v560 = vsub.s32 3, %v559
        %v561 = vrot.slane %v503, %v560
        %v562 = vadd.f32 %v556, %v561
        %v563 = vtanh.pop %v562
        %s564 = sld [smem:[#allocation6 + $0x3]]
        %v565 = vstv %s564
        %v566 = vmul.f32 %v565, %v563
        %v567 = vadd.f32 %v553, %v566
        %568 = vset.pattern.permute.xlu0 4
        %569 = vperm.xlu0 %568, %v421
        %v570 = vpop.permute.xlu0 %569
        %v572 = vlaneseq
        %v573 = vshrl.u32 %v572, 7
        %v574 = vsub.s32 4, %v573
        %v575 = vrot.slane %v503, %v574
        %v576 = vadd.f32 %v570, %v575
        %v577 = vtanh.pop %v576
        %s578 = sld [smem:[#allocation6 + $0x4]]
        %v579 = vstv %s578
        %v580 = vmul.f32 %v579, %v577
        %v581 = vadd.f32 %v567, %v580
        %582 = vset.pattern.permute.xlu0 5
        %583 = vperm.xlu0 %582, %v421
        %v584 = vpop.permute.xlu0 %583
        %v586 = vlaneseq
        %v587 = vshrl.u32 %v586, 7
        %v588 = vsub.s32 5, %v587
        %v589 = vrot.slane %v503, %v588
        %v590 = vadd.f32 %v584, %v589
        %v591 = vtanh.pop %v590
        %s592 = sld [smem:[#allocation6 + $0x5]]
        %v593 = vstv %s592
        %v594 = vmul.f32 %v593, %v591
        %v595 = vadd.f32 %v581, %v594
        %596 = vset.pattern.permute.xlu0 6
        %597 = vperm.xlu0 %596, %v421
        %v598 = vpop.permute.xlu0 %597
        %v600 = vlaneseq
        %v601 = vshrl.u32 %v600, 7
        %v602 = vsub.s32 6, %v601
        %v603 = vrot.slane %v503, %v602
        %v604 = vadd.f32 %v598, %v603
        %v605 = vtanh.pop %v604
        %s606 = sld [smem:[#allocation6 + $0x6]]
        %v607 = vstv %s606
        %v608 = vmul.f32 %v607, %v605
        %v609 = vadd.f32 %v595, %v608
        %610 = vset.pattern.permute.xlu0 7
        %611 = vperm.xlu0 %610, %v421
        %v612 = vpop.permute.xlu0 %611
        %v614 = vlaneseq
        %v615 = vshrl.u32 %v614, 7
        %v616 = vsub.s32 7, %v615
        %v617 = vrot.slane %v503, %v616
        %v618 = vadd.f32 %v612, %v617
        %v619 = vtanh.pop %v618
        %s620 = sld [smem:[#allocation6 + $0x7]]
        %v621 = vstv %s620
        %v622 = vmul.f32 %v621, %v619
        %v623 = vadd.f32 %v609, %v622
        %624 = vset.pattern.permute.xlu0 8
        %625 = vperm.xlu0 %624, %v421
        %v626 = vpop.permute.xlu0 %625
        %v628 = vlaneseq
        %v629 = vshrl.u32 %v628, 7
        %v630 = vsub.s32 0, %v629
        %v631 = vrot.slane %v508, %v630
        %v632 = vadd.f32 %v626, %v631
        %v633 = vtanh.pop %v632
        %s634 = sld [smem:[#allocation6 + $0x8]]
        %v635 = vstv %s634
        %v636 = vmul.f32 %v635, %v633
        %v637 = vadd.f32 %v623, %v636
        %638 = vset.pattern.permute.xlu0 9
        %639 = vperm.xlu0 %638, %v421
        %v640 = vpop.permute.xlu0 %639
        %v642 = vlaneseq
        %v643 = vshrl.u32 %v642, 7
        %v644 = vsub.s32 1, %v643
        %v645 = vrot.slane %v508, %v644
        %v646 = vadd.f32 %v640, %v645
        %v647 = vtanh.pop %v646
        %s648 = sld [smem:[#allocation6 + $0x9]]
        %v649 = vstv %s648
        %v650 = vmul.f32 %v649, %v647
        %v651 = vadd.f32 %v637, %v650
        %652 = vset.pattern.permute.xlu0 10
        %653 = vperm.xlu0 %652, %v421
        %v654 = vpop.permute.xlu0 %653
        %v656 = vlaneseq
        %v657 = vshrl.u32 %v656, 7
        %v658 = vsub.s32 2, %v657
        %v659 = vrot.slane %v508, %v658
        %v660 = vadd.f32 %v654, %v659
        %v661 = vtanh.pop %v660
        %s662 = sld [smem:[#allocation6 + $0xa]]
        %v663 = vstv %s662
        %v664 = vmul.f32 %v663, %v661
        %v665 = vadd.f32 %v651, %v664
        %666 = vset.pattern.permute.xlu0 11
        %667 = vperm.xlu0 %666, %v421
        %v668 = vpop.permute.xlu0 %667
        %v670 = vlaneseq
        %v671 = vshrl.u32 %v670, 7
        %v672 = vsub.s32 3, %v671
        %v673 = vrot.slane %v508, %v672
        %v674 = vadd.f32 %v668, %v673
        %v675 = vtanh.pop %v674
        %s676 = sld [smem:[#allocation6 + $0xb]]
        %v677 = vstv %s676
        %v678 = vmul.f32 %v677, %v675
        %v679 = vadd.f32 %v665, %v678
        %680 = vset.pattern.permute.xlu0 12
        %681 = vperm.xlu0 %680, %v421
        %v682 = vpop.permute.xlu0 %681
        %v684 = vlaneseq
        %v685 = vshrl.u32 %v684, 7
        %v686 = vsub.s32 4, %v685
        %v687 = vrot.slane %v508, %v686
        %v688 = vadd.f32 %v682, %v687
        %v689 = vtanh.pop %v688
        %s690 = sld [smem:[#allocation6 + $0xc]]
        %v691 = vstv %s690
        %v692 = vmul.f32 %v691, %v689
        %v693 = vadd.f32 %v679, %v692
        %694 = vset.pattern.permute.xlu0 13
        %695 = vperm.xlu0 %694, %v421
        %v696 = vpop.permute.xlu0 %695
        %v698 = vlaneseq
        %v699 = vshrl.u32 %v698, 7
        %v700 = vsub.s32 5, %v699
        %v701 = vrot.slane %v508, %v700
        %v702 = vadd.f32 %v696, %v701
        %v703 = vtanh.pop %v702
        %s704 = sld [smem:[#allocation6 + $0xd]]
        %v705 = vstv %s704
        %v706 = vmul.f32 %v705, %v703
        %v707 = vadd.f32 %v693, %v706
        %708 = vset.pattern.permute.xlu0 14
        %709 = vperm.xlu0 %708, %v421
        %v710 = vpop.permute.xlu0 %709
        %v712 = vlaneseq
        %v713 = vshrl.u32 %v712, 7
        %v714 = vsub.s32 6, %v713
        %v715 = vrot.slane %v508, %v714
        %v716 = vadd.f32 %v710, %v715
        %v717 = vtanh.pop %v716
        %s718 = sld [smem:[#allocation6 + $0xe]]
        %v719 = vstv %s718
        %v720 = vmul.f32 %v719, %v717
        %v721 = vadd.f32 %v707, %v720
        %722 = vset.pattern.permute.xlu0 15
        %723 = vperm.xlu0 %722, %v421
        %v724 = vpop.permute.xlu0 %723
        %v726 = vlaneseq
        %v727 = vshrl.u32 %v726, 7
        %v728 = vsub.s32 7, %v727
        %v729 = vrot.slane %v508, %v728
        %v730 = vadd.f32 %v724, %v729
        %v731 = vtanh.pop %v730
        %s732 = sld [smem:[#allocation6 + $0xf]]
        %v733 = vstv %s732
        %v734 = vmul.f32 %v733, %v731
        %v735 = vadd.f32 %v721, %v734
        %736 = vst [vmem:[%s330] sm:$0xff] %v735
        %s737 = sand.u32 %s195, 1
        %s738 = scalar_lea.sflag [#allocation4], %s737
        %s739 = sand.u32 %s195, 1
        %s740 = smul.addr %s739, 8
        %s741 = scalar_lea.vmem [#allocation7], %s740
        // Predicated region
        $region53: #{tpu_custom_call.1} parent=43 // pred_check
          %p742 = pneg %p205
        $region54: #{tpu_custom_call.1} parent=43 // pred_check_branch
          %744 = sbr.rel (%p742) target = $region56
        $region55: #{tpu_custom_call.1} parent=43 // pred_region
          %s746 = ssub.s32 128, 128
          %747 = vsyncadd %s738, %s746
          %s748 = sadd.s32 %s31, %s30
          %s749 = sadd.s32 %s748, %s29
          %s750 = smul.addr %s749, 128
          %s751 = scalar_lea.hbm %s6, %s750
          %s753 = sshll.u32 %s741, 4
          %s754 = int_to_ptr.vmem [resolvable:$true] %s753
          %756 = dma.vmem_to_hbm [thread:$0]  %s754, 128, %s751, %s738
        $region56: #{tpu_custom_call.1} parent=43 // pred_fallthru
          _
      $region44: #{tpu_custom_call.1} parent=5 // pred_fallthru
        _
      %p757 = scmp.le.s32.totalorder 2, %s19
      // Predicated region
      $region57: #{tpu_custom_call.1} parent=5 // pred_check
        %p758 = pneg %p757
      $region58: #{tpu_custom_call.1} parent=5 // pred_check_branch
        %760 = sbr.rel (%p758) target = $region60
      $region59: #{tpu_custom_call.1} parent=5 // pred_region
        %s761 = ssub.s32 %s19, 2
        // Predicated region
        $region61: #{tpu_custom_call.1} parent=59 // pred_check
          %p762 = pneg %p211
        $region62: #{tpu_custom_call.1} parent=59 // pred_check_branch
          %764 = sbr.rel (%p762) target = $region64
        $region63: #{tpu_custom_call.1} parent=59 // pred_region
          %s765 = sand.u32 %s196, 1
          %s766 = scalar_lea.sflag [#allocation4], %s765
          %s767 = sand.u32 %s196, 1
          %s768 = smul.addr %s767, 8
          %s769 = scalar_lea.vmem [#allocation7], %s768
          %770 = dma.done %s766, 128
        $region64: #{tpu_custom_call.1} parent=59 // pred_fallthru
          _
      $region60: #{tpu_custom_call.1} parent=5 // pred_fallthru
        _
    $region6: #{tpu_custom_call.1} parent=1 // loop_footer
      %s23 = sadd.s32 1, %s19
    $region7: #{tpu_custom_call.1} parent=1 // loop_footer_branch
      %18 = sbr.rel target = $region3
    $region8: #{tpu_custom_call.1} parent=1 // loop_exit
      _
    %771 = vsyncpa [#allocation3], 1
    %s772 = scalar_lea.sflag [#allocation3], 1
    %773 = vsyncpa %s772, 1
    %774 = vsyncpa [#allocation4], 1
    %s775 = scalar_lea.sflag [#allocation4], 1
    %776 = vsyncpa %s775, 1
    %777 = vsyncpa [#allocation5], 1
    %s778 = scalar_lea.sflag [#allocation5], 1
    %779 = vsyncpa %s778, 1

</llo_original>
